<compile_context>
chip_gen: v5e
topology: v5e:2x2
jax: 0.10.0
libtpu: 0.0.40
codegen_flags: <defaults>
</compile_context>

<pallas_src>
import jax
import jax.numpy as jnp
from jax.experimental import pallas as pl
from jax.experimental.pallas import tpu as pltpu

SEQ = 8      # input sequence length
BATCH = 8    # batch size (x.shape[1] in the PyTorch module)
HID = 32     # RNN hidden size
NPRED = 4    # number of points to predict

USE_BF16_MXU = False                      # flip to trade ~1e-2 precision for MXU latency
MXU_DTYPE = jnp.bfloat16 if USE_BF16_MXU else jnp.float32


def _dot(a, b):
    return jnp.dot(a.astype(MXU_DTYPE), b.astype(MXU_DTYPE),
                   preferred_element_type=jnp.float32)


def encdec_kernel(x_ref,        # (SEQ, BATCH)        f32
                  w_rec_ref,    # (3*HID, HID)        f32: [w_hh_e_T | w_hh_d_T | w_dec_eff]
                  vecs_ref,     # (8, HID)            f32: packed row vectors (see wrapper)
                  out_ref):     # (NPRED, BATCH)      f32
    seq = x_ref.shape[0]
    batch = x_ref.shape[1]
    hid = w_rec_ref.shape[1]
    npred = out_ref.shape[0]

    # single tiny transpose to the compute layout (batch, seq)
    x_bt = jnp.transpose(x_ref[...])                      # (BATCH, SEQ)

    # static sublane-aligned slices of the packed weight slab (loaded once)
    w_hh_e = w_rec_ref[0:hid, :]                          # (HID, HID)
    w_hh_d = w_rec_ref[hid:2 * hid, :]                    # (HID, HID)
    w_dec = w_rec_ref[2 * hid:3 * hid, :]                 # (HID, HID)  fused decoder weight

    w_ih_e = vecs_ref[0:1, :]                             # (1, HID)
    w_ih_d = vecs_ref[2:3, :]                             # (1, HID)
    w_out_row = vecs_ref[5:6, :]                          # (1, HID)   output head (transposed)
    b_out = vecs_ref[6:7, 0:1]                            # (1, 1)

    # hoisted bias broadcasts (unrolled loops would re-emit broadcast_in_dim)
    b_e_b = jnp.broadcast_to(vecs_ref[1:2, :], (batch, hid))
    b_d_b = jnp.broadcast_to(vecs_ref[3:4, :], (batch, hid))
    b_de_b = jnp.broadcast_to(vecs_ref[4:5, :], (batch, hid))

    # ----- encoder: h_t = tanh(x_t * w_ih_e + h_{t-1} @ w_hh_e^T + b_e) -----
    h = jnp.tanh(x_bt[:, 0:1] * w_ih_e + b_e_b)           # t = 0 (h_{-1} == 0, skip matmul)
    for t in range(1, seq):                               # static unroll, seq is small
        ih = x_bt[:, t:t + 1] * w_ih_e
        h = jnp.tanh(ih + _dot(h, w_hh_e) + b_e_b)

    # ----- decoder step 0: dec_in = last input point -----
    dec_in0 = x_bt[:, seq - 1:seq]                        # (BATCH, 1)
    h = jnp.tanh(dec_in0 * w_ih_d + _dot(h, w_hh_d) + b_d_b)
    h_list = [h]

    # ----- decoder steps 1..npred-1: Linear head folded into the recurrence -----
    for _ in range(1, npred):
        h = jnp.tanh(_dot(h, w_dec) + b_de_b)
        h_list.append(h)

    # ----- output head, applied once: out[t, b] = h_t[b] . w_out + b_out -----
    outs = [jnp.sum(ht * w_out_row, axis=1, keepdims=True) for ht in h_list]  # (BATCH, 1) each
    out_bt = jnp.concatenate(outs, axis=1)                # (BATCH, NPRED)
    out_ref[...] = jnp.transpose(out_bt) + b_out          # one store, (NPRED, BATCH)


def encoder_decoder_forward(x, params):
    """x: (seq, batch) f32 -> (npred, batch) f32 (PyTorch convention, no wrapper transposes)."""
    seq, batch = x.shape
    hid = params["w_hh_e_T"].shape[0]

    # fused decoder weights (algebraic fold of the Linear head, valid for steps t >= 1)
    w_dec_eff = params["w_hh_d_T"] + params["w_out"] @ params["w_ih_d"]        # (HID, HID)
    b_dec_eff = params["b_d"] + params["b_out"] * params["w_ih_d"]             # (1, HID)

    # pack all parameters into two slabs (3 DMAs total incl. x, instead of 10)
    w_rec = jnp.concatenate(
        [params["w_hh_e_T"], params["w_hh_d_T"], w_dec_eff], axis=0)           # (3*HID, HID)
    vecs = jnp.concatenate(
        [params["w_ih_e"],                       # row 0
         params["b_e"],                          # row 1
         params["w_ih_d"],                       # row 2
         params["b_d"],                          # row 3
         b_dec_eff,                              # row 4
         params["w_out"].T,                      # row 5
         jnp.broadcast_to(params["b_out"], (1, hid)),   # row 6
         jnp.zeros((1, hid), jnp.float32)],      # row 7 (pad to full sublane tile)
        axis=0)                                                                # (8, HID)

    vmem = pl.BlockSpec(memory_space=pltpu.MemorySpace.VMEM)
    return pl.pallas_call(
        encdec_kernel,
        out_shape=jax.ShapeDtypeStruct((NPRED, batch), jnp.float32),
        in_specs=[vmem, vmem, vmem],
        out_specs=vmem,
    )(x, w_rec, vecs)


def reference_forward(x, params):
    """Pure-JAX f32 mirror of the PyTorch EncoderDecoder.forward with RNN enc/dec."""
    seq, batch = x.shape
    hid = params["w_hh_e_T"].shape[0]
    h = jnp.zeros((batch, hid), jnp.float32)
    for t in range(seq):
        x_t = x[t][:, None]                                                    # (batch, 1)
        h = jnp.tanh(x_t @ params["w_ih_e"] + h @ params["w_hh_e_T"] + params["b_e"])
    dec_in = x[-1][:, None]
    outs = []
    for _ in range(NPRED):
        h = jnp.tanh(dec_in @ params["w_ih_d"] + h @ params["w_hh_d_T"] + params["b_d"])
        dec_out = h @ params["w_out"] + params["b_out"]                        # (batch, 1)
        outs.append(dec_out[:, 0])
        dec_in = dec_out
    return jnp.stack(outs, axis=0)                                             # (npred, batch)


def init_params(key):
    ks = jax.random.split(key, 8)
    s = 0.3
    return {
        "w_ih_e":   s * jax.random.normal(ks[0], (1, HID), jnp.float32),
        "w_hh_e_T": s * jax.random.normal(ks[1], (HID, HID), jnp.float32),
        "b_e":      s * jax.random.normal(ks[2], (1, HID), jnp.float32),
        "w_ih_d":   s * jax.random.normal(ks[3], (1, HID), jnp.float32),
        "w_hh_d_T": s * jax.random.normal(ks[4], (HID, HID), jnp.float32),
        "b_d":      s * jax.random.normal(ks[5], (1, HID), jnp.float32),
        "w_out":    s * jax.random.normal(ks[6], (HID, 1), jnp.float32),
        "b_out":    s * jax.random.normal(ks[7], (1, 1), jnp.float32),
    }


if __name__ == "__main__":
    key = jax.random.PRNGKey(0)
    k_x, k_p = jax.random.split(key)
    x = jax.random.normal(k_x, (SEQ, BATCH), jnp.float32)   # (seq, batch) as in PyTorch
    params = init_params(k_p)

    fwd = jax.jit(encoder_decoder_forward)                  # param packing fuses with the call
    out = jax.block_until_ready(fwd(x, params))

    ref = reference_forward(x, params)
    assert out.shape == (NPRED, BATCH), out.shape
    tol = 1e-2 if USE_BF16_MXU else 1e-5
    assert jnp.allclose(out, ref, rtol=tol, atol=tol), (
        f"max abs err {jnp.max(jnp.abs(out - ref))}")

    print("KERNEL_OK")
</pallas_src>

<mosaic_0001>
module attributes {stable_mosaic.version = 11 : i64} {
  func.func @encdec_kernel(%arg0: memref<8x8xf32, #tpu.memory_space<vmem>>, %arg1: memref<96x32xf32, #tpu.memory_space<vmem>>, %arg2: memref<8x32xf32, #tpu.memory_space<vmem>>, %arg3: memref<4x8xf32, #tpu.memory_space<vmem>>) attributes {dimension_semantics = [], scalar_prefetch = 0 : i64, scratch_operands = 0 : i64, tpu.core_type = #tpu.core_type<tc>} {
    %c0 = arith.constant 0 : index
    %c0_0 = arith.constant 0 : index
    %0 = vector.load %arg0[%c0, %c0_0] : memref<8x8xf32, #tpu.memory_space<vmem>>, vector<8x8xf32>
    %1 = tpu.transpose %0, [1, 0] : vector<8x8xf32> -> vector<8x8xf32>
    %c0_1 = arith.constant 0 : index
    %c0_2 = arith.constant 0 : index
    %2 = vector.load %arg1[%c0_1, %c0_2] : memref<96x32xf32, #tpu.memory_space<vmem>>, vector<32x32xf32>
    %c32 = arith.constant 32 : index
    %c0_3 = arith.constant 0 : index
    %3 = vector.load %arg1[%c32, %c0_3] : memref<96x32xf32, #tpu.memory_space<vmem>>, vector<32x32xf32>
    %c64 = arith.constant 64 : index
    %c0_4 = arith.constant 0 : index
    %4 = vector.load %arg1[%c64, %c0_4] : memref<96x32xf32, #tpu.memory_space<vmem>>, vector<32x32xf32>
    %c0_5 = arith.constant 0 : index
    %c0_6 = arith.constant 0 : index
    %5 = vector.load %arg2[%c0_5, %c0_6] : memref<8x32xf32, #tpu.memory_space<vmem>>, vector<1x32xf32>
    %c2 = arith.constant 2 : index
    %c0_7 = arith.constant 0 : index
    %6 = vector.load %arg2[%c2, %c0_7] : memref<8x32xf32, #tpu.memory_space<vmem>>, vector<1x32xf32>
    %c5 = arith.constant 5 : index
    %c0_8 = arith.constant 0 : index
    %7 = vector.load %arg2[%c5, %c0_8] : memref<8x32xf32, #tpu.memory_space<vmem>>, vector<1x32xf32>
    %c6 = arith.constant 6 : index
    %c0_9 = arith.constant 0 : index
    %8 = vector.load %arg2[%c6, %c0_9] : memref<8x32xf32, #tpu.memory_space<vmem>>, vector<1x1xf32>
    %c1 = arith.constant 1 : index
    %c0_10 = arith.constant 0 : index
    %9 = vector.load %arg2[%c1, %c0_10] : memref<8x32xf32, #tpu.memory_space<vmem>>, vector<1x32xf32>
    %10 = vector.shape_cast %9 : vector<1x32xf32> to vector<1x32xf32>
    %11 = vector.broadcast %10 : vector<1x32xf32> to vector<8x32xf32>
    %c3 = arith.constant 3 : index
    %c0_11 = arith.constant 0 : index
    %12 = vector.load %arg2[%c3, %c0_11] : memref<8x32xf32, #tpu.memory_space<vmem>>, vector<1x32xf32>
    %13 = vector.shape_cast %12 : vector<1x32xf32> to vector<1x32xf32>
    %14 = vector.broadcast %13 : vector<1x32xf32> to vector<8x32xf32>
    %c4 = arith.constant 4 : index
    %c0_12 = arith.constant 0 : index
    %15 = vector.load %arg2[%c4, %c0_12] : memref<8x32xf32, #tpu.memory_space<vmem>>, vector<1x32xf32>
    %16 = vector.shape_cast %15 : vector<1x32xf32> to vector<1x32xf32>
    %17 = vector.broadcast %16 : vector<1x32xf32> to vector<8x32xf32>
    %18 = vector.extract_strided_slice %1 {offsets = [0, 0], sizes = [8, 1], strides = [1, 1]} : vector<8x8xf32> to vector<8x1xf32>
    %19 = vector.broadcast %18 : vector<8x1xf32> to vector<8x32xf32>
    %20 = vector.broadcast %5 : vector<1x32xf32> to vector<8x32xf32>
    %21 = arith.mulf %19, %20 : vector<8x32xf32>
    %22 = arith.addf %21, %11 : vector<8x32xf32>
    %23 = math.tanh %22 : vector<8x32xf32>
    %24 = vector.extract_strided_slice %1 {offsets = [0, 1], sizes = [8, 1], strides = [1, 1]} : vector<8x8xf32> to vector<8x1xf32>
    %25 = vector.broadcast %24 : vector<8x1xf32> to vector<8x32xf32>
    %26 = vector.broadcast %5 : vector<1x32xf32> to vector<8x32xf32>
    %27 = arith.mulf %25, %26 : vector<8x32xf32>
    %cst = arith.constant dense<0.000000e+00> : vector<8x32xf32>
    %28 = tpu.matmul %23, %2, %cst {dimension_numbers = #tpu.dot_dimension_numbers<[1], [0], [0], [1], [0, 0, 1, 1], [], []>} : vector<8x32xf32>, vector<32x32xf32>, vector<8x32xf32> -> vector<8x32xf32>
    %29 = arith.addf %27, %28 : vector<8x32xf32>
    %30 = arith.addf %29, %11 : vector<8x32xf32>
    %31 = math.tanh %30 : vector<8x32xf32>
    %32 = vector.extract_strided_slice %1 {offsets = [0, 2], sizes = [8, 1], strides = [1, 1]} : vector<8x8xf32> to vector<8x1xf32>
    %33 = vector.broadcast %32 : vector<8x1xf32> to vector<8x32xf32>
    %34 = vector.broadcast %5 : vector<1x32xf32> to vector<8x32xf32>
    %35 = arith.mulf %33, %34 : vector<8x32xf32>
    %cst_13 = arith.constant dense<0.000000e+00> : vector<8x32xf32>
    %36 = tpu.matmul %31, %2, %cst_13 {dimension_numbers = #tpu.dot_dimension_numbers<[1], [0], [0], [1], [0, 0, 1, 1], [], []>} : vector<8x32xf32>, vector<32x32xf32>, vector<8x32xf32> -> vector<8x32xf32>
    %37 = arith.addf %35, %36 : vector<8x32xf32>
    %38 = arith.addf %37, %11 : vector<8x32xf32>
    %39 = math.tanh %38 : vector<8x32xf32>
    %40 = vector.extract_strided_slice %1 {offsets = [0, 3], sizes = [8, 1], strides = [1, 1]} : vector<8x8xf32> to vector<8x1xf32>
    %41 = vector.broadcast %40 : vector<8x1xf32> to vector<8x32xf32>
    %42 = vector.broadcast %5 : vector<1x32xf32> to vector<8x32xf32>
    %43 = arith.mulf %41, %42 : vector<8x32xf32>
    %cst_14 = arith.constant dense<0.000000e+00> : vector<8x32xf32>
    %44 = tpu.matmul %39, %2, %cst_14 {dimension_numbers = #tpu.dot_dimension_numbers<[1], [0], [0], [1], [0, 0, 1, 1], [], []>} : vector<8x32xf32>, vector<32x32xf32>, vector<8x32xf32> -> vector<8x32xf32>
    %45 = arith.addf %43, %44 : vector<8x32xf32>
    %46 = arith.addf %45, %11 : vector<8x32xf32>
    %47 = math.tanh %46 : vector<8x32xf32>
    %48 = vector.extract_strided_slice %1 {offsets = [0, 4], sizes = [8, 1], strides = [1, 1]} : vector<8x8xf32> to vector<8x1xf32>
    %49 = vector.broadcast %48 : vector<8x1xf32> to vector<8x32xf32>
    %50 = vector.broadcast %5 : vector<1x32xf32> to vector<8x32xf32>
    %51 = arith.mulf %49, %50 : vector<8x32xf32>
    %cst_15 = arith.constant dense<0.000000e+00> : vector<8x32xf32>
    %52 = tpu.matmul %47, %2, %cst_15 {dimension_numbers = #tpu.dot_dimension_numbers<[1], [0], [0], [1], [0, 0, 1, 1], [], []>} : vector<8x32xf32>, vector<32x32xf32>, vector<8x32xf32> -> vector<8x32xf32>
    %53 = arith.addf %51, %52 : vector<8x32xf32>
    %54 = arith.addf %53, %11 : vector<8x32xf32>
    %55 = math.tanh %54 : vector<8x32xf32>
    %56 = vector.extract_strided_slice %1 {offsets = [0, 5], sizes = [8, 1], strides = [1, 1]} : vector<8x8xf32> to vector<8x1xf32>
    %57 = vector.broadcast %56 : vector<8x1xf32> to vector<8x32xf32>
    %58 = vector.broadcast %5 : vector<1x32xf32> to vector<8x32xf32>
    %59 = arith.mulf %57, %58 : vector<8x32xf32>
    %cst_16 = arith.constant dense<0.000000e+00> : vector<8x32xf32>
    %60 = tpu.matmul %55, %2, %cst_16 {dimension_numbers = #tpu.dot_dimension_numbers<[1], [0], [0], [1], [0, 0, 1, 1], [], []>} : vector<8x32xf32>, vector<32x32xf32>, vector<8x32xf32> -> vector<8x32xf32>
    %61 = arith.addf %59, %60 : vector<8x32xf32>
    %62 = arith.addf %61, %11 : vector<8x32xf32>
    %63 = math.tanh %62 : vector<8x32xf32>
    %64 = vector.extract_strided_slice %1 {offsets = [0, 6], sizes = [8, 1], strides = [1, 1]} : vector<8x8xf32> to vector<8x1xf32>
    %65 = vector.broadcast %64 : vector<8x1xf32> to vector<8x32xf32>
    %66 = vector.broadcast %5 : vector<1x32xf32> to vector<8x32xf32>
    %67 = arith.mulf %65, %66 : vector<8x32xf32>
    %cst_17 = arith.constant dense<0.000000e+00> : vector<8x32xf32>
    %68 = tpu.matmul %63, %2, %cst_17 {dimension_numbers = #tpu.dot_dimension_numbers<[1], [0], [0], [1], [0, 0, 1, 1], [], []>} : vector<8x32xf32>, vector<32x32xf32>, vector<8x32xf32> -> vector<8x32xf32>
    %69 = arith.addf %67, %68 : vector<8x32xf32>
    %70 = arith.addf %69, %11 : vector<8x32xf32>
    %71 = math.tanh %70 : vector<8x32xf32>
    %72 = vector.extract_strided_slice %1 {offsets = [0, 7], sizes = [8, 1], strides = [1, 1]} : vector<8x8xf32> to vector<8x1xf32>
    %73 = vector.broadcast %72 : vector<8x1xf32> to vector<8x32xf32>
    %74 = vector.broadcast %5 : vector<1x32xf32> to vector<8x32xf32>
    %75 = arith.mulf %73, %74 : vector<8x32xf32>
    %cst_18 = arith.constant dense<0.000000e+00> : vector<8x32xf32>
    %76 = tpu.matmul %71, %2, %cst_18 {dimension_numbers = #tpu.dot_dimension_numbers<[1], [0], [0], [1], [0, 0, 1, 1], [], []>} : vector<8x32xf32>, vector<32x32xf32>, vector<8x32xf32> -> vector<8x32xf32>
    %77 = arith.addf %75, %76 : vector<8x32xf32>
    %78 = arith.addf %77, %11 : vector<8x32xf32>
    %79 = math.tanh %78 : vector<8x32xf32>
    %80 = vector.extract_strided_slice %1 {offsets = [0, 7], sizes = [8, 1], strides = [1, 1]} : vector<8x8xf32> to vector<8x1xf32>
    %81 = vector.broadcast %80 : vector<8x1xf32> to vector<8x32xf32>
    %82 = vector.broadcast %6 : vector<1x32xf32> to vector<8x32xf32>
    %83 = arith.mulf %81, %82 : vector<8x32xf32>
    %cst_19 = arith.constant dense<0.000000e+00> : vector<8x32xf32>
    %84 = tpu.matmul %79, %3, %cst_19 {dimension_numbers = #tpu.dot_dimension_numbers<[1], [0], [0], [1], [0, 0, 1, 1], [], []>} : vector<8x32xf32>, vector<32x32xf32>, vector<8x32xf32> -> vector<8x32xf32>
    %85 = arith.addf %83, %84 : vector<8x32xf32>
    %86 = arith.addf %85, %14 : vector<8x32xf32>
    %87 = math.tanh %86 : vector<8x32xf32>
    %cst_20 = arith.constant dense<0.000000e+00> : vector<8x32xf32>
    %88 = tpu.matmul %87, %4, %cst_20 {dimension_numbers = #tpu.dot_dimension_numbers<[1], [0], [0], [1], [0, 0, 1, 1], [], []>} : vector<8x32xf32>, vector<32x32xf32>, vector<8x32xf32> -> vector<8x32xf32>
    %89 = arith.addf %88, %17 : vector<8x32xf32>
    %90 = math.tanh %89 : vector<8x32xf32>
    %cst_21 = arith.constant dense<0.000000e+00> : vector<8x32xf32>
    %91 = tpu.matmul %90, %4, %cst_21 {dimension_numbers = #tpu.dot_dimension_numbers<[1], [0], [0], [1], [0, 0, 1, 1], [], []>} : vector<8x32xf32>, vector<32x32xf32>, vector<8x32xf32> -> vector<8x32xf32>
    %92 = arith.addf %91, %17 : vector<8x32xf32>
    %93 = math.tanh %92 : vector<8x32xf32>
    %cst_22 = arith.constant dense<0.000000e+00> : vector<8x32xf32>
    %94 = tpu.matmul %93, %4, %cst_22 {dimension_numbers = #tpu.dot_dimension_numbers<[1], [0], [0], [1], [0, 0, 1, 1], [], []>} : vector<8x32xf32>, vector<32x32xf32>, vector<8x32xf32> -> vector<8x32xf32>
    %95 = arith.addf %94, %17 : vector<8x32xf32>
    %96 = math.tanh %95 : vector<8x32xf32>
    %97 = vector.broadcast %7 : vector<1x32xf32> to vector<8x32xf32>
    %98 = arith.mulf %87, %97 : vector<8x32xf32>
    %cst_23 = arith.constant dense<0.000000e+00> : vector<8xf32>
    %99 = vector.multi_reduction <add>, %98, %cst_23 [1] : vector<8x32xf32> to vector<8xf32>
    %100 = vector.shape_cast %99 : vector<8xf32> to vector<8x1xf32>
    %101 = vector.broadcast %7 : vector<1x32xf32> to vector<8x32xf32>
    %102 = arith.mulf %90, %101 : vector<8x32xf32>
    %cst_24 = arith.constant dense<0.000000e+00> : vector<8xf32>
    %103 = vector.multi_reduction <add>, %102, %cst_24 [1] : vector<8x32xf32> to vector<8xf32>
    %104 = vector.shape_cast %103 : vector<8xf32> to vector<8x1xf32>
    %105 = vector.broadcast %7 : vector<1x32xf32> to vector<8x32xf32>
    %106 = arith.mulf %93, %105 : vector<8x32xf32>
    %cst_25 = arith.constant dense<0.000000e+00> : vector<8xf32>
    %107 = vector.multi_reduction <add>, %106, %cst_25 [1] : vector<8x32xf32> to vector<8xf32>
    %108 = vector.shape_cast %107 : vector<8xf32> to vector<8x1xf32>
    %109 = vector.broadcast %7 : vector<1x32xf32> to vector<8x32xf32>
    %110 = arith.mulf %96, %109 : vector<8x32xf32>
    %cst_26 = arith.constant dense<0.000000e+00> : vector<8xf32>
    %111 = vector.multi_reduction <add>, %110, %cst_26 [1] : vector<8x32xf32> to vector<8xf32>
    %112 = vector.shape_cast %111 : vector<8xf32> to vector<8x1xf32>
    %113 = tpu.concatenate %100, %104, %108, %112 in 1 : vector<8x1xf32>, vector<8x1xf32>, vector<8x1xf32>, vector<8x1xf32> -> vector<8x4xf32>
    %114 = tpu.transpose %113, [1, 0] : vector<8x4xf32> -> vector<4x8xf32>
    %115 = vector.broadcast %8 : vector<1x1xf32> to vector<4x8xf32>
    %116 = arith.addf %114, %115 : vector<4x8xf32>
    %c0_27 = arith.constant 0 : index
    %c0_28 = arith.constant 0 : index
    %117 = vector.load %arg3[%c0_27, %c0_28] : memref<4x8xf32, #tpu.memory_space<vmem>>, vector<4x8xf32>
    tpu.vector_store %arg3[%c0_27, %c0_28], %116 {strides = array<i32>} : memref<4x8xf32, #tpu.memory_space<vmem>>, vector<4x8xf32>,
    return
  }
}

</mosaic_0001>

<llo_original>
// kernel: mul.6
$region0: #{mul.6}
  #allocation0 [shape = 's32[1]{0}', space=sflag, size = 0x4, scoped, tag = 'scoped memory for mul.6']
  %s0 = inlined_call_operand.<no memory space> [shape: f32[], index: 0, kind: input, shape index: {}]
  %s1 = inlined_call_operand.vmem [shape: f32[1,32], index: 1, kind: output, shape index: {}]
  %v2 = vstv %s0
  %3 = vst [vmem:[%s1] sm:$0x1] %v2

// kernel: encoder_decoder_forward.1
$region0: #{encoder_decoder_forward.1}
  #allocation0 [shape = 'u32[]', space=smem, size = 0x4, offset = 0x4, fixed_abs, tag = 'smem constant byte address 0x4 - core index']
  #allocation1 [shape = 'u32[72,128]{1,0:T(1,128)}', space=vmem, size = 0x9000, scoped, tag = 'internal scratch']
  %s0 = inlined_call_operand.vmem [shape: f32[8,8], index: 0, kind: input, shape index: {}]
  %s1 = inlined_call_operand.vmem [shape: f32[96,32], index: 1, kind: input, shape index: {}]
  %s2 = inlined_call_operand.vmem [shape: f32[8,32], index: 2, kind: input, shape index: {}]
  %s3 = inlined_call_operand.hbm [shape: f32[4,8], index: 3, kind: output, shape index: {}]
  %s4 = sld [smem:[#allocation0]]
  $region22: #{encoder_decoder_forward.1} parent=0
    _
  %s6 = ssub.s32 1, %s4
  %s7 = scalar_select 0, %s6, %s4
  $region1: #{encoder_decoder_forward.1} parent=0
    #allocation2 [shape = 'u8[2048]{0}', space=vmem, size = 0x800, scoped, tag = 'output window, operand 0, single buffered']
    #allocation3 [shape = 's32[1]{0}', space=sflag, size = 0x4, scoped, tag = 'scoped memory for encoder_decoder_forward.1']
    %8 = vsyncpa [#allocation3], 0
    // Predicated region
    $region2: #{encoder_decoder_forward.1} parent=1 // pred_check
      _
    $region3: #{encoder_decoder_forward.1} parent=1 // pred_check_branch
      %10 = sbr.rel (0) target = $region5
    $region4: #{encoder_decoder_forward.1} parent=1 // pred_region
      _
    $region5: #{encoder_decoder_forward.1} parent=1 // pred_fallthru
      _
    // Predicated region
    $region6: #{encoder_decoder_forward.1} parent=1 // pred_check
      _
    $region7: #{encoder_decoder_forward.1} parent=1 // pred_check_branch
      %12 = sbr.rel (0) target = $region9
    $region8: #{encoder_decoder_forward.1} parent=1 // pred_region
      _
    $region9: #{encoder_decoder_forward.1} parent=1 // pred_fallthru
      _
    // Predicated region
    $region10: #{encoder_decoder_forward.1} parent=1 // pred_check
      _
    $region11: #{encoder_decoder_forward.1} parent=1 // pred_check_branch
      %14 = sbr.rel (0) target = $region13
    $region12: #{encoder_decoder_forward.1} parent=1 // pred_region
      _
    $region13: #{encoder_decoder_forward.1} parent=1 // pred_fallthru
      _
    %v15 = vld [vmem:[%s0] sm:$0xff]
    %16 = vxpose.xlu0.b32.start [1/16] %v15, 128
    %17 = vxpose.xlu0.b32.cont [2/16] 0.0, 128
    %18 = vxpose.xlu0.b32.cont [3/16] 0.0, 128
    %19 = vxpose.xlu0.b32.cont [4/16] 0.0, 128
    %20 = vxpose.xlu0.b32.cont [5/16] 0.0, 128
    %21 = vxpose.xlu0.b32.cont [6/16] 0.0, 128
    %22 = vxpose.xlu0.b32.cont [7/16] 0.0, 128
    %23 = vxpose.xlu0.b32.cont [8/16] 0.0, 128
    %24 = vxpose.xlu0.b32.cont [9/16] 0.0, 128
    %25 = vxpose.xlu0.b32.cont [10/16] 0.0, 128
    %26 = vxpose.xlu0.b32.cont [11/16] 0.0, 128
    %27 = vxpose.xlu0.b32.cont [12/16] 0.0, 128
    %28 = vxpose.xlu0.b32.cont [13/16] 0.0, 128
    %29 = vxpose.xlu0.b32.cont [14/16] 0.0, 128
    %30 = vxpose.xlu0.b32.cont [15/16] 0.0, 128
    %31 = vxpose.xlu0.b32.end [16/16] 0.0, 128
    %v32 = vpop.trf.xlu0
    %v33 = vpop.trf.xlu0
    %v34 = vpop.trf.xlu0
    %v35 = vpop.trf.xlu0
    %v36 = vpop.trf.xlu0
    %v37 = vpop.trf.xlu0
    %v38 = vpop.trf.xlu0
    %v39 = vpop.trf.xlu0
    %v40 = vpop.trf.xlu0
    %v41 = vpop.trf.xlu0
    %v42 = vpop.trf.xlu0
    %v43 = vpop.trf.xlu0
    %v44 = vpop.trf.xlu0
    %v45 = vpop.trf.xlu0
    %v46 = vpop.trf.xlu0
    %v47 = vpop.trf.xlu0
    %v48 = vld [vmem:[%s1] sm:$0xff]
    %v49 = vld [vmem:[%s1 + $0x8] sm:$0xff]
    %v50 = vld [vmem:[%s1 + $0x10] sm:$0xff]
    %v51 = vld [vmem:[%s1 + $0x18] sm:$0xff]
    %v52 = vld [vmem:[%s1 + $0x20] sm:$0xff]
    %v53 = vld [vmem:[%s1 + $0x28] sm:$0xff]
    %v54 = vld [vmem:[%s1 + $0x30] sm:$0xff]
    %v55 = vld [vmem:[%s1 + $0x38] sm:$0xff]
    %v56 = vld [vmem:[%s1 + $0x40] sm:$0xff]
    %v57 = vld [vmem:[%s1 + $0x48] sm:$0xff]
    %v58 = vld [vmem:[%s1 + $0x50] sm:$0xff]
    %v59 = vld [vmem:[%s1 + $0x58] sm:$0xff]
    %v60 = vld [vmem:[%s2] sm:$0x1]
    %v61 = vld [vmem:[%s2 + $0x2] sm:$0x1]
    %v62 = vld [vmem:[%s2 + $0x5] sm:$0x1]
    %v63 = vld [vmem:[%s2 + $0x6] sm:$0x1]
    %v64 = vld [vmem:[%s2 + $0x1] sm:$0x1]
    %v65 = vperm.slane %v64, 0
    %v66 = vld [vmem:[%s2 + $0x3] sm:$0x1]
    %v67 = vperm.slane %v66, 0
    %v68 = vld [vmem:[%s2 + $0x4] sm:$0x1]
    %v69 = vperm.slane %v68, 0
    %71 = vset.pattern.permute.xlu0 0
    %72 = vperm.xlu0 %71, %v32
    %v73 = vpop.permute.xlu0 %72
    %v75 = vperm.slane %v60, 0
    %v76 = vmul.f32 %v73, %v75
    %v77 = vadd.f32 %v76, %v65
    %v78 = vtanh.pop %v77
    %79 = vset.pattern.permute.xlu0 1
    %80 = vperm.xlu0 %79, %v32
    %v81 = vpop.permute.xlu0 %80
    %v83 = vmul.f32 %v81, %v75
    %vm84 = vcmask 261120
    %v86 = vsel %vm84, %v78, 0
    %88 = vmatpush.msra.mxu0 0.0
    %89 = vmatpush.msra.mxu0 0.0
    %90 = vmatpush.msra.mxu0 0.0
    %91 = vmatpush.msra.mxu0 0.0
    %92 = vmatpush.msra.mxu0 0.0
    %93 = vmatpush.msra.mxu0 0.0
    %94 = vmatpush.msra.mxu0 0.0
    %95 = vmatpush.msra.mxu0 0.0
    %96 = vmatpush.msra.mxu0 0.0
    %97 = vmatpush.msra.mxu0 0.0
    %98 = vmatpush.msra.mxu0 0.0
    %99 = vmatpush.msra.mxu0 0.0
    %100 = vmatpush.msra.mxu0 %v51
    %101 = vmatpush.msra.mxu0 %v50
    %102 = vmatpush.msra.mxu0 %v49
    %103 = vmatpush.msra.mxu0 %v48
    %104 = vmatmul.f32.gmra.mxu0 %v86
    %v105 = vpop.f32.mrf.mxu0
    %v106 = vadd.f32 0.0, %v105
    %107 = vdwg.mxu0
    %v108 = vadd.f32 %v83, %v106
    %v109 = vadd.f32 %v108, %v65
    %v110 = vtanh.pop %v109
    %111 = vset.pattern.permute.xlu0 2
    %112 = vperm.xlu0 %111, %v32
    %v113 = vpop.permute.xlu0 %112
    %v115 = vmul.f32 %v113, %v75
    %v117 = vsel %vm84, %v110, 0
    %119 = vmatpush.msra.mxu0 0.0
    %120 = vmatpush.msra.mxu0 0.0
    %121 = vmatpush.msra.mxu0 0.0
    %122 = vmatpush.msra.mxu0 0.0
    %123 = vmatpush.msra.mxu0 0.0
    %124 = vmatpush.msra.mxu0 0.0
    %125 = vmatpush.msra.mxu0 0.0
    %126 = vmatpush.msra.mxu0 0.0
    %127 = vmatpush.msra.mxu0 0.0
    %128 = vmatpush.msra.mxu0 0.0
    %129 = vmatpush.msra.mxu0 0.0
    %130 = vmatpush.msra.mxu0 0.0
    %131 = vmatpush.msra.mxu0 %v51
    %132 = vmatpush.msra.mxu0 %v50
    %133 = vmatpush.msra.mxu0 %v49
    %134 = vmatpush.msra.mxu0 %v48
    %135 = vmatmul.f32.gmra.mxu0 %v117
    %v136 = vpop.f32.mrf.mxu0
    %v137 = vadd.f32 0.0, %v136
    %138 = vdwg.mxu0
    %v139 = vadd.f32 %v115, %v137
    %v140 = vadd.f32 %v139, %v65
    %v141 = vtanh.pop %v140
    %142 = vset.pattern.permute.xlu0 3
    %143 = vperm.xlu0 %142, %v32
    %v144 = vpop.permute.xlu0 %143
    %v146 = vmul.f32 %v144, %v75
    %v148 = vsel %vm84, %v141, 0
    %150 = vmatpush.msra.mxu0 0.0
    %151 = vmatpush.msra.mxu0 0.0
    %152 = vmatpush.msra.mxu0 0.0
    %153 = vmatpush.msra.mxu0 0.0
    %154 = vmatpush.msra.mxu0 0.0
    %155 = vmatpush.msra.mxu0 0.0
    %156 = vmatpush.msra.mxu0 0.0
    %157 = vmatpush.msra.mxu0 0.0
    %158 = vmatpush.msra.mxu0 0.0
    %159 = vmatpush.msra.mxu0 0.0
    %160 = vmatpush.msra.mxu0 0.0
    %161 = vmatpush.msra.mxu0 0.0
    %162 = vmatpush.msra.mxu0 %v51
    %163 = vmatpush.msra.mxu0 %v50
    %164 = vmatpush.msra.mxu0 %v49
    %165 = vmatpush.msra.mxu0 %v48
    %166 = vmatmul.f32.gmra.mxu0 %v148
    %v167 = vpop.f32.mrf.mxu0
    %v168 = vadd.f32 0.0, %v167
    %169 = vdwg.mxu0
    %v170 = vadd.f32 %v146, %v168
    %v171 = vadd.f32 %v170, %v65
    %v172 = vtanh.pop %v171
    %173 = vset.pattern.permute.xlu0 4
    %174 = vperm.xlu0 %173, %v32
    %v175 = vpop.permute.xlu0 %174
    %v177 = vmul.f32 %v175, %v75
    %v179 = vsel %vm84, %v172, 0
    %181 = vmatpush.msra.mxu0 0.0
    %182 = vmatpush.msra.mxu0 0.0
    %183 = vmatpush.msra.mxu0 0.0
    %184 = vmatpush.msra.mxu0 0.0
    %185 = vmatpush.msra.mxu0 0.0
    %186 = vmatpush.msra.mxu0 0.0
    %187 = vmatpush.msra.mxu0 0.0
    %188 = vmatpush.msra.mxu0 0.0
    %189 = vmatpush.msra.mxu0 0.0
    %190 = vmatpush.msra.mxu0 0.0
    %191 = vmatpush.msra.mxu0 0.0
    %192 = vmatpush.msra.mxu0 0.0
    %193 = vmatpush.msra.mxu0 %v51
    %194 = vmatpush.msra.mxu0 %v50
    %195 = vmatpush.msra.mxu0 %v49
    %196 = vmatpush.msra.mxu0 %v48
    %197 = vmatmul.f32.gmra.mxu0 %v179
    %v198 = vpop.f32.mrf.mxu0
    %v199 = vadd.f32 0.0, %v198
    %200 = vdwg.mxu0
    %v201 = vadd.f32 %v177, %v199
    %v202 = vadd.f32 %v201, %v65
    %v203 = vtanh.pop %v202
    %204 = vset.pattern.permute.xlu0 5
    %205 = vperm.xlu0 %204, %v32
    %v206 = vpop.permute.xlu0 %205
    %v208 = vmul.f32 %v206, %v75
    %v210 = vsel %vm84, %v203, 0
    %212 = vmatpush.msra.mxu0 0.0
    %213 = vmatpush.msra.mxu0 0.0
    %214 = vmatpush.msra.mxu0 0.0
    %215 = vmatpush.msra.mxu0 0.0
    %216 = vmatpush.msra.mxu0 0.0
    %217 = vmatpush.msra.mxu0 0.0
    %218 = vmatpush.msra.mxu0 0.0
    %219 = vmatpush.msra.mxu0 0.0
    %220 = vmatpush.msra.mxu0 0.0
    %221 = vmatpush.msra.mxu0 0.0
    %222 = vmatpush.msra.mxu0 0.0
    %223 = vmatpush.msra.mxu0 0.0
    %224 = vmatpush.msra.mxu0 %v51
    %225 = vmatpush.msra.mxu0 %v50
    %226 = vmatpush.msra.mxu0 %v49
    %227 = vmatpush.msra.mxu0 %v48
    %228 = vmatmul.f32.gmra.mxu0 %v210
    %v229 = vpop.f32.mrf.mxu0
    %v230 = vadd.f32 0.0, %v229
    %231 = vdwg.mxu0
    %v232 = vadd.f32 %v208, %v230
    %v233 = vadd.f32 %v232, %v65
    %v234 = vtanh.pop %v233
    %235 = vset.pattern.permute.xlu0 6
    %236 = vperm.xlu0 %235, %v32
    %v237 = vpop.permute.xlu0 %236
    %v239 = vmul.f32 %v237, %v75
    %v241 = vsel %vm84, %v234, 0
    %243 = vmatpush.msra.mxu0 0.0
    %244 = vmatpush.msra.mxu0 0.0
    %245 = vmatpush.msra.mxu0 0.0
    %246 = vmatpush.msra.mxu0 0.0
    %247 = vmatpush.msra.mxu0 0.0
    %248 = vmatpush.msra.mxu0 0.0
    %249 = vmatpush.msra.mxu0 0.0
    %250 = vmatpush.msra.mxu0 0.0
    %251 = vmatpush.msra.mxu0 0.0
    %252 = vmatpush.msra.mxu0 0.0
    %253 = vmatpush.msra.mxu0 0.0
    %254 = vmatpush.msra.mxu0 0.0
    %255 = vmatpush.msra.mxu0 %v51
    %256 = vmatpush.msra.mxu0 %v50
    %257 = vmatpush.msra.mxu0 %v49
    %258 = vmatpush.msra.mxu0 %v48
    %259 = vmatmul.f32.gmra.mxu0 %v241
    %v260 = vpop.f32.mrf.mxu0
    %v261 = vadd.f32 0.0, %v260
    %262 = vdwg.mxu0
    %v263 = vadd.f32 %v239, %v261
    %v264 = vadd.f32 %v263, %v65
    %v265 = vtanh.pop %v264
    %266 = vset.pattern.permute.xlu0 7
    %267 = vperm.xlu0 %266, %v32
    %v268 = vpop.permute.xlu0 %267
    %v270 = vmul.f32 %v268, %v75
    %v272 = vsel %vm84, %v265, 0
    %274 = vmatpush.msra.mxu0 0.0
    %275 = vmatpush.msra.mxu0 0.0
    %276 = vmatpush.msra.mxu0 0.0
    %277 = vmatpush.msra.mxu0 0.0
    %278 = vmatpush.msra.mxu0 0.0
    %279 = vmatpush.msra.mxu0 0.0
    %280 = vmatpush.msra.mxu0 0.0
    %281 = vmatpush.msra.mxu0 0.0
    %282 = vmatpush.msra.mxu0 0.0
    %283 = vmatpush.msra.mxu0 0.0
    %284 = vmatpush.msra.mxu0 0.0
    %285 = vmatpush.msra.mxu0 0.0
    %286 = vmatpush.msra.mxu0 %v51
    %287 = vmatpush.msra.mxu0 %v50
    %288 = vmatpush.msra.mxu0 %v49
    %289 = vmatpush.msra.mxu0 %v48
    %290 = vmatmul.f32.gmra.mxu0 %v272
    %v291 = vpop.f32.mrf.mxu0
    %v292 = vadd.f32 0.0, %v291
    %293 = vdwg.mxu0
    %v294 = vadd.f32 %v270, %v292
    %v295 = vadd.f32 %v294, %v65
    %v296 = vtanh.pop %v295
    %v297 = vperm.slane %v61, 0
    %v298 = vmul.f32 %v268, %v297
    %v300 = vsel %vm84, %v296, 0
    %302 = vmatpush.msra.mxu0 0.0
    %303 = vmatpush.msra.mxu0 0.0
    %304 = vmatpush.msra.mxu0 0.0
    %305 = vmatpush.msra.mxu0 0.0
    %306 = vmatpush.msra.mxu0 0.0
    %307 = vmatpush.msra.mxu0 0.0
    %308 = vmatpush.msra.mxu0 0.0
    %309 = vmatpush.msra.mxu0 0.0
    %310 = vmatpush.msra.mxu0 0.0
    %311 = vmatpush.msra.mxu0 0.0
    %312 = vmatpush.msra.mxu0 0.0
    %313 = vmatpush.msra.mxu0 0.0
    %314 = vmatpush.msra.mxu0 %v55
    %315 = vmatpush.msra.mxu0 %v54
    %316 = vmatpush.msra.mxu0 %v53
    %317 = vmatpush.msra.mxu0 %v52
    %318 = vmatmul.f32.gmra.mxu0 %v300
    %v319 = vpop.f32.mrf.mxu0
    %v320 = vadd.f32 0.0, %v319
    %321 = vdwg.mxu0
    %v322 = vadd.f32 %v298, %v320
    %v323 = vadd.f32 %v322, %v67
    %v324 = vtanh.pop %v323
    %v326 = vsel %vm84, %v324, 0
    %328 = vmatpush.msra.mxu0 0.0
    %329 = vmatpush.msra.mxu0 0.0
    %330 = vmatpush.msra.mxu0 0.0
    %331 = vmatpush.msra.mxu0 0.0
    %332 = vmatpush.msra.mxu0 0.0
    %333 = vmatpush.msra.mxu0 0.0
    %334 = vmatpush.msra.mxu0 0.0
    %335 = vmatpush.msra.mxu0 0.0
    %336 = vmatpush.msra.mxu0 0.0
    %337 = vmatpush.msra.mxu0 0.0
    %338 = vmatpush.msra.mxu0 0.0
    %339 = vmatpush.msra.mxu0 0.0
    %340 = vmatpush.msra.mxu0 %v59
    %341 = vmatpush.msra.mxu0 %v58
    %342 = vmatpush.msra.mxu0 %v57
    %343 = vmatpush.msra.mxu0 %v56
    %344 = vmatmul.f32.gmra.mxu0 %v326
    %v345 = vpop.f32.mrf.mxu0
    %v346 = vadd.f32 %v69, %v345
    %347 = vdwg.mxu0
    %v348 = vtanh.pop %v346
    %v350 = vsel %vm84, %v348, 0
    %352 = vmatpush.msra.mxu0 0.0
    %353 = vmatpush.msra.mxu0 0.0
    %354 = vmatpush.msra.mxu0 0.0
    %355 = vmatpush.msra.mxu0 0.0
    %356 = vmatpush.msra.mxu0 0.0
    %357 = vmatpush.msra.mxu0 0.0
    %358 = vmatpush.msra.mxu0 0.0
    %359 = vmatpush.msra.mxu0 0.0
    %360 = vmatpush.msra.mxu0 0.0
    %361 = vmatpush.msra.mxu0 0.0
    %362 = vmatpush.msra.mxu0 0.0
    %363 = vmatpush.msra.mxu0 0.0
    %364 = vmatpush.msra.mxu0 %v59
    %365 = vmatpush.msra.mxu0 %v58
    %366 = vmatpush.msra.mxu0 %v57
    %367 = vmatpush.msra.mxu0 %v56
    %368 = vmatmul.f32.gmra.mxu0 %v350
    %v369 = vpop.f32.mrf.mxu0
    %v370 = vadd.f32 %v69, %v369
    %371 = vdwg.mxu0
    %v372 = vtanh.pop %v370
    %v374 = vsel %vm84, %v372, 0
    %376 = vmatpush.msra.mxu0 0.0
    %377 = vmatpush.msra.mxu0 0.0
    %378 = vmatpush.msra.mxu0 0.0
    %379 = vmatpush.msra.mxu0 0.0
    %380 = vmatpush.msra.mxu0 0.0
    %381 = vmatpush.msra.mxu0 0.0
    %382 = vmatpush.msra.mxu0 0.0
    %383 = vmatpush.msra.mxu0 0.0
    %384 = vmatpush.msra.mxu0 0.0
    %385 = vmatpush.msra.mxu0 0.0
    %386 = vmatpush.msra.mxu0 0.0
    %387 = vmatpush.msra.mxu0 0.0
    %388 = vmatpush.msra.mxu0 %v59
    %389 = vmatpush.msra.mxu0 %v58
    %390 = vmatpush.msra.mxu0 %v57
    %391 = vmatpush.msra.mxu0 %v56
    %392 = vmatmul.f32.gmra.mxu0 %v374
    %v393 = vpop.f32.mrf.mxu0
    %v394 = vadd.f32 %v69, %v393
    %395 = vdwg.mxu0
    %v396 = vtanh.pop %v394
    %v397 = vperm.slane %v62, 0
    %v398 = vmul.f32 %v324, %v397
    %v399 = vsel %vm84, %v398, 0.0
    %400 = vadd.xlane.f32.xlu0 %v399
    %v401 = vpop.xlane.xlu0 %400
    %v402 = vmul.f32 %v348, %v397
    %v403 = vsel %vm84, %v402, 0.0
    %404 = vadd.xlane.f32.xlu0 %v403
    %v405 = vpop.xlane.xlu0 %404
    %v406 = vmul.f32 %v372, %v397
    %v407 = vsel %vm84, %v406, 0.0
    %408 = vadd.xlane.f32.xlu0 %v407
    %v409 = vpop.xlane.xlu0 %408
    %v410 = vmul.f32 %v396, %v397
    %v411 = vsel %vm84, %v410, 0.0
    %412 = vadd.xlane.f32.xlu0 %v411
    %v413 = vpop.xlane.xlu0 %412
    %vm414 = vcmask 7168
    %v415 = vsel %vm414, %v401, %v405
    %vm416 = vcmask 15360
    %v417 = vsel %vm416, %v415, %v409
    %vm418 = vcmask 23552
    %v419 = vsel %vm418, %v417, %v413
    %420 = vxpose.xlu0.b32.start [1/16] %v419, 128
    %421 = vxpose.xlu0.b32.cont [2/16] 0.0, 128
    %422 = vxpose.xlu0.b32.cont [3/16] 0.0, 128
    %423 = vxpose.xlu0.b32.cont [4/16] 0.0, 128
    %424 = vxpose.xlu0.b32.cont [5/16] 0.0, 128
    %425 = vxpose.xlu0.b32.cont [6/16] 0.0, 128
    %426 = vxpose.xlu0.b32.cont [7/16] 0.0, 128
    %427 = vxpose.xlu0.b32.cont [8/16] 0.0, 128
    %428 = vxpose.xlu0.b32.cont [9/16] 0.0, 128
    %429 = vxpose.xlu0.b32.cont [10/16] 0.0, 128
    %430 = vxpose.xlu0.b32.cont [11/16] 0.0, 128
    %431 = vxpose.xlu0.b32.cont [12/16] 0.0, 128
    %432 = vxpose.xlu0.b32.cont [13/16] 0.0, 128
    %433 = vxpose.xlu0.b32.cont [14/16] 0.0, 128
    %434 = vxpose.xlu0.b32.cont [15/16] 0.0, 128
    %435 = vxpose.xlu0.b32.end [16/16] 0.0, 128
    %v436 = vpop.trf.xlu0
    %v437 = vpop.trf.xlu0
    %v438 = vpop.trf.xlu0
    %v439 = vpop.trf.xlu0
    %v440 = vpop.trf.xlu0
    %v441 = vpop.trf.xlu0
    %v442 = vpop.trf.xlu0
    %v443 = vpop.trf.xlu0
    %v444 = vpop.trf.xlu0
    %v445 = vpop.trf.xlu0
    %v446 = vpop.trf.xlu0
    %v447 = vpop.trf.xlu0
    %v448 = vpop.trf.xlu0
    %v449 = vpop.trf.xlu0
    %v450 = vpop.trf.xlu0
    %v451 = vpop.trf.xlu0
    %s453 = vtos %v63
    %v454 = vstv %s453
    %v456 = vadd.f32 %v436, %v454
    %vm457 = vcmask 60416
    %458 = vst.msk [vmem:[#allocation2] sm:$0xf] %vm457, %v456
    // Predicated region
    $region14: #{encoder_decoder_forward.1} parent=1 // pred_check
      _
    $region15: #{encoder_decoder_forward.1} parent=1 // pred_check_branch
      %460 = sbr.rel (0) target = $region17
    $region16: #{encoder_decoder_forward.1} parent=1 // pred_region
      %462 = vsyncadd [#allocation3], 0
      %s464 = sshll.u32 [#allocation2], 4
      %s465 = int_to_ptr.vmem [resolvable:$true] %s464
      %s466 = sshll.u32 %s3, 4
      %s467 = int_to_ptr.hbm [resolvable:$true] %s466
      %469 = dma.vmem_to_hbm [thread:$0]  %s465, 64, %s467, [#allocation3]
    $region17: #{encoder_decoder_forward.1} parent=1 // pred_fallthru
      _
    // Predicated region
    $region18: #{encoder_decoder_forward.1} parent=1 // pred_check
      _
    $region19: #{encoder_decoder_forward.1} parent=1 // pred_check_branch
      %471 = sbr.rel (0) target = $region21
    $region20: #{encoder_decoder_forward.1} parent=1 // pred_region
      %473 = dma.done [#allocation3], 64
    $region21: #{encoder_decoder_forward.1} parent=1 // pred_fallthru
      _
    %474 = vsyncpa [#allocation3], 1

</llo_original>
